<compile_context>
chip_gen: v5e
topology: v5e:2x2
jax: 0.10.0
libtpu: 0.0.40
codegen_flags: <defaults>
</compile_context>

<pallas_src>
import functools

import jax
import jax.numpy as jnp
from jax.experimental import pallas as pl
from jax.experimental.pallas import tpu as pltpu

ALPHA = 0.25     # focal alpha
GAMMA = 2.0      # focal gamma (statically 2 -> explicit square, no lax.pow)
DICE_EPS = 1e-7


def _round_up(x, m):
    return (x + m - 1) // m * m


def _hyperloss_kernel(pred_ref, mask_ref, out_ref, *, n_classes, has_pad):
    """pred_ref: (C, St, 128) logits (native float dtype) for one pixel tile.
    mask_ref:  (St, 128) int labels (-1 = padding, only when has_pad).
    out_ref:   (4*C, 128) f32 lane-partial accumulators for this (batch, chunk):
               rows [0:C)   dice intersection, [C:2C)  dice cardinality,
                    [2C:3C) true count,        [3C:4C) focal sum.
    """
    # First pixel tile of this (batch, chunk) -> zero its accumulator slab.
    @pl.when(pl.program_id(2) == 0)
    def _():
        out_ref[...] = jnp.zeros_like(out_ref)

    C = n_classes
    st = mask_ref.shape[0]
    m = mask_ref[...]

    # Per-class upcast in VMEM (inputs stream from HBM in their native dtype).
    xs = [pred_ref[c].astype(jnp.float32) for c in range(C)]

    # ---- softmax over classes, unrolled over the (small) class axis ----
    xmax = xs[0]
    for c in range(1, C):
        xmax = jnp.maximum(xmax, xs[c])
    es = [jnp.exp(xs[c] - xmax) for c in range(C)]
    denom = es[0]
    for c in range(1, C):
        denom = denom + es[c]
    # EUP approx reciprocal + one Newton step instead of an exact VALU divide.
    inv_denom = pl.reciprocal(denom, approx=True)
    inv_denom = inv_denom * (2.0 - denom * inv_denom)
    if has_pad:
        valid = (m >= 0).astype(jnp.float32)          # padded labels are -1
        inv_denom = inv_denom * valid                 # folds padding mask into p

    # Column (sublane) reductions: route through the idle MXU for real tiles;
    # tiny tiles (demo-sized images) keep the plain VALU sum.
    use_mxu = (st >= 64) and (st % 8 == 0)
    if use_mxu:
        ones_lhs = jnp.ones((8, st), jnp.float32)     # hoisted constant (16 KiB max)

        def colsum(a):                                 # (st,128) -> (1,128)
            r = jnp.dot(ones_lhs, a,
                        preferred_element_type=jnp.float32,
                        precision=jax.lax.Precision.HIGHEST)
            return r[0:1, :]
    else:
        def colsum(a):
            return jnp.sum(a, axis=0, keepdims=True)

    inter_l, card_l, tsum_l, fsum_l = [], [], [], []
    for c in range(C):
        x = xs[c]
        t = (m == c).astype(jnp.float32)
        p = es[c] * inv_denom                          # (masked) softmax prob

        # ---- focal (binary-with-logits per class, smp multiclass mode) ----
        u = jnp.exp(-jnp.abs(x))                       # exp(-|x|)
        logpt = jnp.maximum(x, 0.0) - x * t + jnp.log1p(u)   # stable BCE-with-logits
        one_plus_u = 1.0 + u
        r = pl.reciprocal(one_plus_u, approx=True)     # EUP, off the VALU
        r = r * (2.0 - one_plus_u * r)                 # one Newton refinement
        # ft = 1 - exp(-logpt) without a second exp and without a divide:
        #   exp(-(max(x,0) - x*t)) == u when (x>=0) xor (t==1), else 1
        flip = (x >= 0.0) != (t > 0.5)
        ft = jnp.where(flip, 1.0, u) * r
        alpha_w = (1.0 - ALPHA) + (2.0 * ALPHA - 1.0) * t    # == a*t + (1-a)*(1-t)
        focal = (ft * ft) * logpt * alpha_w            # gamma == 2 -> explicit square
        if has_pad:
            focal = focal * valid

        tsum_c = colsum(t)                             # (1, 128)
        inter_l.append(colsum(p * t))
        card_l.append(colsum(p) + tsum_c)
        tsum_l.append(tsum_c)
        fsum_l.append(colsum(focal))

    # Flattened lane-dense (4*C, 128) slab: full (8,128) store tiles for even C.
    out_ref[...] += jnp.concatenate(inter_l + card_l + tsum_l + fsum_l, axis=0)


def _choose_tiling(S, C, pred_itemsize, mask_itemsize, s_tile, N):
    """Pick (sublane_tile, padded_S, n_chunks, tiles_per_chunk)."""
    # Double-buffered inputs + ~3 live f32 per-class intermediates per sublane row.
    row_bytes = 2 * 128 * (C * pred_itemsize + mask_itemsize) + 3 * C * 128 * 4
    budget = 20 * 1024 * 1024                 # headroom under the 32 MiB scoped limit
    cap = max(32, budget // row_bytes)
    st = min(s_tile, cap)
    if st >= S:
        # Whole pixel range fits in one tile.
        if N == 1 and S >= 64 and S % 64 == 0:
            return S // 2, S, 2, 1            # feed v7x's second TensorCore at N == 1
        return S, S, 1, 1
    st = max(32, (st // 32) * 32)             # sublane-safe for f32 / bf16 / int8 blocks
    n_tiles = -(-S // st)
    st = _round_up(-(-S // n_tiles), 32)      # equalize tiles -> minimal padding
    S_pad = st * n_tiles
    n_chunks = 2 if (N == 1 and n_tiles % 2 == 0) else 1
    return st, S_pad, n_chunks, n_tiles // n_chunks


@functools.partial(jax.jit, static_argnames=("s_tile",))
def hyperloss_forward(pred, mask, *, s_tile=512):
    """pred: (N, C, H, W) float logits; mask: (N, H, W) int labels in [0, C)."""
    N, C, H, W = pred.shape
    HW = H * W
    P = N * HW

    # Keep pred in its native float dtype (bf16/f16 stream straight from HBM).
    if not jnp.issubdtype(pred.dtype, jnp.floating):
        pred = pred.astype(jnp.float32)
    x = pred.reshape(N, C, HW)                          # free view of NCHW
    m = mask if jnp.issubdtype(mask.dtype, jnp.signedinteger) else mask.astype(jnp.int32)
    m = m.reshape(N, HW)

    S = _round_up(HW, 128) // 128
    st, S_pad, n_chunks, tiles_per_chunk = _choose_tiling(
        S, C, x.dtype.itemsize, m.dtype.itemsize, s_tile, N)

    # One fused host pad (lane alignment + tile alignment), only when needed.
    total_pad = S_pad * 128 - HW
    has_pad = total_pad > 0
    if has_pad:
        x = jnp.pad(x, ((0, 0), (0, 0), (0, total_pad)))
        m = jnp.pad(m, ((0, 0), (0, total_pad)), constant_values=-1)

    x = x.reshape(N, C, S_pad, 128)
    m = m.reshape(N, S_pad, 128)

    kernel = functools.partial(_hyperloss_kernel, n_classes=C, has_pad=has_pad)

    out = pl.pallas_call(
        kernel,
        out_shape=jax.ShapeDtypeStruct((N, n_chunks, 4 * C, 128), jnp.float32),
        grid_spec=pltpu.PrefetchScalarGridSpec(
            num_scalar_prefetch=0,
            grid=(N, n_chunks, tiles_per_chunk),
            in_specs=[
                pl.BlockSpec((pl.Squeezed(), C, st, 128),
                             lambda n, ch, s: (n, 0, ch * tiles_per_chunk + s, 0)),
                pl.BlockSpec((pl.Squeezed(), st, 128),
                             lambda n, ch, s: (n, ch * tiles_per_chunk + s, 0)),
            ],
            out_specs=pl.BlockSpec((pl.Squeezed(), pl.Squeezed(), 4 * C, 128),
                                   lambda n, ch, s: (n, ch, 0, 0)),
        ),
        compiler_params=pltpu.CompilerParams(
            dimension_semantics=("parallel", "parallel", "arbitrary"),
            vmem_limit_bytes=32 * 1024 * 1024),
    )(x, m)

    acc = jnp.sum(out, axis=(0, 1, 3)).reshape(4, C)    # reduce slabs + lanes -> (4, C)
    inter, card, tsum, fsum = acc[0], acc[1], acc[2], acc[3]

    # Dice (smp): score_c = 2*I_c / clamp(card_c, eps); zeroed for absent classes,
    # mean over classes.
    dice_score = (2.0 * inter) / jnp.maximum(card, DICE_EPS)
    dice_loss = jnp.mean((1.0 - dice_score) * (tsum > 0).astype(jnp.float32))

    # Focal (smp): per-class mean over all N*H*W pixels, summed over classes.
    focal_loss = jnp.sum(fsum) / jnp.float32(P)

    return focal_loss + dice_loss


def _hyperloss_reference(pred, mask):
    """Pure-JAX reference of the smp Focal+Dice multiclass losses (for sanity)."""
    N, C, H, W = pred.shape
    x = pred.astype(jnp.float32)
    t = jax.nn.one_hot(mask, C, axis=1, dtype=jnp.float32)        # (N, C, H, W)
    # focal
    logpt = jnp.maximum(x, 0.0) - x * t + jnp.log1p(jnp.exp(-jnp.abs(x)))
    pt = jnp.exp(-logpt)
    focal = ((1.0 - pt) ** GAMMA) * logpt * (ALPHA * t + (1.0 - ALPHA) * (1.0 - t))
    focal_loss = jnp.sum(jnp.mean(focal, axis=(0, 2, 3)))
    # dice
    p = jax.nn.softmax(x, axis=1)
    dims = (0, 2, 3)
    inter = jnp.sum(p * t, axis=dims)
    card = jnp.sum(p + t, axis=dims)
    score = 2.0 * inter / jnp.maximum(card, DICE_EPS)
    dice_loss = jnp.mean((1.0 - score) * (jnp.sum(t, axis=dims) > 0))
    return focal_loss + dice_loss


def _check(key, N, C, H, W):
    k_pred, k_mask = jax.random.split(key)
    pred = jax.random.normal(k_pred, (N, C, H, W), dtype=jnp.float32)
    mask = jax.random.randint(k_mask, (N, H, W), 0, C, dtype=jnp.int32)
    got = jax.block_until_ready(hyperloss_forward(pred, mask))
    ref = jax.block_until_ready(_hyperloss_reference(pred, mask))
    assert jnp.allclose(got, ref, rtol=1e-4, atol=1e-4), ((N, C, H, W), got, ref)


if __name__ == "__main__":
    key = jax.random.PRNGKey(0)
    keys = jax.random.split(key, 3)
    # Small module-consistent shape (single full tile, VALU-sum path, no padding).
    _check(keys[0], 2, 4, 16, 16)
    # MXU column-reduction path (st = 128, no padding).
    _check(keys[1], 2, 4, 128, 128)
    # Ragged pixel count + N==1 chunked pixel axis (padding path, 2 parallel chunks).
    _check(keys[2], 1, 4, 320, 320)
    print("KERNEL_OK")
</pallas_src>

<mosaic_0001>
module attributes {stable_mosaic.version = 11 : i64} {
  func.func @_hyperloss_kernel(%arg0: i32, %arg1: i32, %arg2: i32, %arg3: memref<1x4x2x128xf32, #tpu.memory_space<vmem>>, %arg4: memref<1x2x128xi32, #tpu.memory_space<vmem>>, %arg5: memref<1x1x16x128xf32, #tpu.memory_space<vmem>>) attributes {dimension_semantics = [#tpu.dimension_semantics<parallel>, #tpu.dimension_semantics<parallel>, #tpu.dimension_semantics<arbitrary>], iteration_bounds = array<i64: 2, 1, 1>, scalar_prefetch = 0 : i64, scratch_operands = 0 : i64, tpu.core_type = #tpu.core_type<tc>, window_params = [{transform_indices = @transform_0, window_bounds = array<i64: 1, 4, 2, 128>}, {transform_indices = @transform_1, window_bounds = array<i64: 1, 2, 128>}, {transform_indices = @transform_2, window_bounds = array<i64: 1, 1, 16, 128>}]} {
    %c0_i32 = arith.constant 0 : i32
    %0 = arith.cmpi eq, %arg2, %c0_i32 : i32
    %1 = arith.extui %0 : i1 to i32
    %c0_i32_0 = arith.constant 0 : i32
    %2 = arith.cmpi ne, %1, %c0_i32_0 : i32
    scf.if %2 {
      %cst_77 = arith.constant 0.000000e+00 : f32
      %227 = vector.broadcast %cst_77 : f32 to vector<16x128xf32>
      %c0_78 = arith.constant 0 : index
      %c0_79 = arith.constant 0 : index
      %c0_80 = arith.constant 0 : index
      %c0_81 = arith.constant 0 : index
      %228 = vector.load %arg5[%c0_78, %c0_79, %c0_80, %c0_81] : memref<1x1x16x128xf32, #tpu.memory_space<vmem>>, vector<1x1x16x128xf32>
      %229 = vector.shape_cast %228 : vector<1x1x16x128xf32> to vector<16x128xf32>
      %230 = vector.shape_cast %227 : vector<16x128xf32> to vector<1x1x16x128xf32>
      tpu.vector_store %arg5[%c0_78, %c0_79, %c0_80, %c0_81], %230 {strides = array<i32>} : memref<1x1x16x128xf32, #tpu.memory_space<vmem>>, vector<1x1x16x128xf32>,
    } else {
    }
    %c0 = arith.constant 0 : index
    %c0_1 = arith.constant 0 : index
    %c0_2 = arith.constant 0 : index
    %3 = vector.load %arg4[%c0, %c0_1, %c0_2] : memref<1x2x128xi32, #tpu.memory_space<vmem>>, vector<1x2x128xi32>
    %4 = vector.shape_cast %3 : vector<1x2x128xi32> to vector<2x128xi32>
    %c0_3 = arith.constant 0 : index
    %c0_4 = arith.constant 0 : index
    %c0_5 = arith.constant 0 : index
    %c0_6 = arith.constant 0 : index
    %5 = vector.load %arg3[%c0_3, %c0_4, %c0_5, %c0_6] : memref<1x4x2x128xf32, #tpu.memory_space<vmem>>, vector<1x1x2x128xf32>
    %6 = vector.shape_cast %5 : vector<1x1x2x128xf32> to vector<2x128xf32>
    %c0_7 = arith.constant 0 : index
    %c1 = arith.constant 1 : index
    %c0_8 = arith.constant 0 : index
    %c0_9 = arith.constant 0 : index
    %7 = vector.load %arg3[%c0_7, %c1, %c0_8, %c0_9] : memref<1x4x2x128xf32, #tpu.memory_space<vmem>>, vector<1x1x2x128xf32>
    %8 = vector.shape_cast %7 : vector<1x1x2x128xf32> to vector<2x128xf32>
    %c0_10 = arith.constant 0 : index
    %c2 = arith.constant 2 : index
    %c0_11 = arith.constant 0 : index
    %c0_12 = arith.constant 0 : index
    %9 = vector.load %arg3[%c0_10, %c2, %c0_11, %c0_12] : memref<1x4x2x128xf32, #tpu.memory_space<vmem>>, vector<1x1x2x128xf32>
    %10 = vector.shape_cast %9 : vector<1x1x2x128xf32> to vector<2x128xf32>
    %c0_13 = arith.constant 0 : index
    %c3 = arith.constant 3 : index
    %c0_14 = arith.constant 0 : index
    %c0_15 = arith.constant 0 : index
    %11 = vector.load %arg3[%c0_13, %c3, %c0_14, %c0_15] : memref<1x4x2x128xf32, #tpu.memory_space<vmem>>, vector<1x1x2x128xf32>
    %12 = vector.shape_cast %11 : vector<1x1x2x128xf32> to vector<2x128xf32>
    %13 = arith.maximumf %6, %8 : vector<2x128xf32>
    %14 = arith.maximumf %13, %10 : vector<2x128xf32>
    %15 = arith.maximumf %14, %12 : vector<2x128xf32>
    %16 = arith.subf %6, %15 : vector<2x128xf32>
    %17 = math.exp %16 : vector<2x128xf32>
    %18 = arith.subf %8, %15 : vector<2x128xf32>
    %19 = math.exp %18 : vector<2x128xf32>
    %20 = arith.subf %10, %15 : vector<2x128xf32>
    %21 = math.exp %20 : vector<2x128xf32>
    %22 = arith.subf %12, %15 : vector<2x128xf32>
    %23 = math.exp %22 : vector<2x128xf32>
    %24 = arith.addf %17, %19 : vector<2x128xf32>
    %25 = arith.addf %24, %21 : vector<2x128xf32>
    %26 = arith.addf %25, %23 : vector<2x128xf32>
    %27 = tpu.reciprocal %26 {approx = true} : vector<2x128xf32> -> vector<2x128xf32>
    %28 = arith.mulf %26, %27 : vector<2x128xf32>
    %cst = arith.constant 2.000000e+00 : f32
    %29 = vector.broadcast %cst : f32 to vector<2x128xf32>
    %30 = arith.subf %29, %28 : vector<2x128xf32>
    %31 = arith.mulf %27, %30 : vector<2x128xf32>
    %c0_i32_16 = arith.constant 0 : i32
    %32 = vector.broadcast %c0_i32_16 : i32 to vector<2x128xi32>
    %33 = arith.cmpi eq, %4, %32 : vector<2x128xi32>
    %34 = arith.extui %33 : vector<2x128xi1> to vector<2x128xi32>
    %35 = arith.sitofp %34 : vector<2x128xi32> to vector<2x128xf32>
    %36 = arith.mulf %17, %31 : vector<2x128xf32>
    %37 = math.absf %6 : vector<2x128xf32>
    %cst_17 = arith.constant 0.000000e+00 : f32
    %38 = vector.broadcast %cst_17 : f32 to vector<2x128xf32>
    %39 = arith.subf %38, %37 : vector<2x128xf32>
    %40 = math.exp %39 : vector<2x128xf32>
    %cst_18 = arith.constant 0.000000e+00 : f32
    %41 = vector.broadcast %cst_18 : f32 to vector<2x128xf32>
    %42 = arith.maximumf %6, %41 : vector<2x128xf32>
    %43 = arith.mulf %6, %35 : vector<2x128xf32>
    %44 = arith.subf %42, %43 : vector<2x128xf32>
    %45 = math.log1p %40 : vector<2x128xf32>
    %46 = arith.addf %44, %45 : vector<2x128xf32>
    %cst_19 = arith.constant 1.000000e+00 : f32
    %47 = vector.broadcast %cst_19 : f32 to vector<2x128xf32>
    %48 = arith.addf %47, %40 : vector<2x128xf32>
    %49 = tpu.reciprocal %48 {approx = true} : vector<2x128xf32> -> vector<2x128xf32>
    %50 = arith.mulf %48, %49 : vector<2x128xf32>
    %cst_20 = arith.constant 2.000000e+00 : f32
    %51 = vector.broadcast %cst_20 : f32 to vector<2x128xf32>
    %52 = arith.subf %51, %50 : vector<2x128xf32>
    %53 = arith.mulf %49, %52 : vector<2x128xf32>
    %cst_21 = arith.constant 0.000000e+00 : f32
    %54 = vector.broadcast %cst_21 : f32 to vector<2x128xf32>
    %55 = arith.cmpf oge, %6, %54 : vector<2x128xf32>
    %cst_22 = arith.constant 5.000000e-01 : f32
    %56 = vector.broadcast %cst_22 : f32 to vector<2x128xf32>
    %57 = arith.cmpf ogt, %35, %56 : vector<2x128xf32>
    %58 = arith.xori %55, %57 : vector<2x128xi1>
    %cst_23 = arith.constant 1.000000e+00 : f32
    %59 = vector.broadcast %cst_23 : f32 to vector<2x128xf32>
    %60 = arith.select %58, %59, %40 : vector<2x128xi1>, vector<2x128xf32>
    %61 = arith.mulf %60, %53 : vector<2x128xf32>
    %cst_24 = arith.constant -5.000000e-01 : f32
    %62 = vector.broadcast %cst_24 : f32 to vector<2x128xf32>
    %63 = arith.mulf %62, %35 : vector<2x128xf32>
    %cst_25 = arith.constant 7.500000e-01 : f32
    %64 = vector.broadcast %cst_25 : f32 to vector<2x128xf32>
    %65 = arith.addf %64, %63 : vector<2x128xf32>
    %66 = arith.mulf %61, %61 : vector<2x128xf32>
    %67 = arith.mulf %66, %46 : vector<2x128xf32>
    %68 = arith.mulf %67, %65 : vector<2x128xf32>
    %cst_26 = arith.constant dense<0.000000e+00> : vector<128xf32>
    %69 = vector.multi_reduction <add>, %35, %cst_26 [0] : vector<2x128xf32> to vector<128xf32>
    %70 = vector.shape_cast %69 : vector<128xf32> to vector<1x128xf32>
    %71 = arith.mulf %36, %35 : vector<2x128xf32>
    %cst_27 = arith.constant dense<0.000000e+00> : vector<128xf32>
    %72 = vector.multi_reduction <add>, %71, %cst_27 [0] : vector<2x128xf32> to vector<128xf32>
    %73 = vector.shape_cast %72 : vector<128xf32> to vector<1x128xf32>
    %cst_28 = arith.constant dense<0.000000e+00> : vector<128xf32>
    %74 = vector.multi_reduction <add>, %36, %cst_28 [0] : vector<2x128xf32> to vector<128xf32>
    %75 = vector.shape_cast %74 : vector<128xf32> to vector<1x128xf32>
    %76 = arith.addf %75, %70 : vector<1x128xf32>
    %cst_29 = arith.constant dense<0.000000e+00> : vector<128xf32>
    %77 = vector.multi_reduction <add>, %68, %cst_29 [0] : vector<2x128xf32> to vector<128xf32>
    %78 = vector.shape_cast %77 : vector<128xf32> to vector<1x128xf32>
    %c1_i32 = arith.constant 1 : i32
    %79 = vector.broadcast %c1_i32 : i32 to vector<2x128xi32>
    %80 = arith.cmpi eq, %4, %79 : vector<2x128xi32>
    %81 = arith.extui %80 : vector<2x128xi1> to vector<2x128xi32>
    %82 = arith.sitofp %81 : vector<2x128xi32> to vector<2x128xf32>
    %83 = arith.mulf %19, %31 : vector<2x128xf32>
    %84 = math.absf %8 : vector<2x128xf32>
    %cst_30 = arith.constant 0.000000e+00 : f32
    %85 = vector.broadcast %cst_30 : f32 to vector<2x128xf32>
    %86 = arith.subf %85, %84 : vector<2x128xf32>
    %87 = math.exp %86 : vector<2x128xf32>
    %cst_31 = arith.constant 0.000000e+00 : f32
    %88 = vector.broadcast %cst_31 : f32 to vector<2x128xf32>
    %89 = arith.maximumf %8, %88 : vector<2x128xf32>
    %90 = arith.mulf %8, %82 : vector<2x128xf32>
    %91 = arith.subf %89, %90 : vector<2x128xf32>
    %92 = math.log1p %87 : vector<2x128xf32>
    %93 = arith.addf %91, %92 : vector<2x128xf32>
    %cst_32 = arith.constant 1.000000e+00 : f32
    %94 = vector.broadcast %cst_32 : f32 to vector<2x128xf32>
    %95 = arith.addf %94, %87 : vector<2x128xf32>
    %96 = tpu.reciprocal %95 {approx = true} : vector<2x128xf32> -> vector<2x128xf32>
    %97 = arith.mulf %95, %96 : vector<2x128xf32>
    %cst_33 = arith.constant 2.000000e+00 : f32
    %98 = vector.broadcast %cst_33 : f32 to vector<2x128xf32>
    %99 = arith.subf %98, %97 : vector<2x128xf32>
    %100 = arith.mulf %96, %99 : vector<2x128xf32>
    %cst_34 = arith.constant 0.000000e+00 : f32
    %101 = vector.broadcast %cst_34 : f32 to vector<2x128xf32>
    %102 = arith.cmpf oge, %8, %101 : vector<2x128xf32>
    %cst_35 = arith.constant 5.000000e-01 : f32
    %103 = vector.broadcast %cst_35 : f32 to vector<2x128xf32>
    %104 = arith.cmpf ogt, %82, %103 : vector<2x128xf32>
    %105 = arith.xori %102, %104 : vector<2x128xi1>
    %cst_36 = arith.constant 1.000000e+00 : f32
    %106 = vector.broadcast %cst_36 : f32 to vector<2x128xf32>
    %107 = arith.select %105, %106, %87 : vector<2x128xi1>, vector<2x128xf32>
    %108 = arith.mulf %107, %100 : vector<2x128xf32>
    %cst_37 = arith.constant -5.000000e-01 : f32
    %109 = vector.broadcast %cst_37 : f32 to vector<2x128xf32>
    %110 = arith.mulf %109, %82 : vector<2x128xf32>
    %cst_38 = arith.constant 7.500000e-01 : f32
    %111 = vector.broadcast %cst_38 : f32 to vector<2x128xf32>
    %112 = arith.addf %111, %110 : vector<2x128xf32>
    %113 = arith.mulf %108, %108 : vector<2x128xf32>
    %114 = arith.mulf %113, %93 : vector<2x128xf32>
    %115 = arith.mulf %114, %112 : vector<2x128xf32>
    %cst_39 = arith.constant dense<0.000000e+00> : vector<128xf32>
    %116 = vector.multi_reduction <add>, %82, %cst_39 [0] : vector<2x128xf32> to vector<128xf32>
    %117 = vector.shape_cast %116 : vector<128xf32> to vector<1x128xf32>
    %118 = arith.mulf %83, %82 : vector<2x128xf32>
    %cst_40 = arith.constant dense<0.000000e+00> : vector<128xf32>
    %119 = vector.multi_reduction <add>, %118, %cst_40 [0] : vector<2x128xf32> to vector<128xf32>
    %120 = vector.shape_cast %119 : vector<128xf32> to vector<1x128xf32>
    %cst_41 = arith.constant dense<0.000000e+00> : vector<128xf32>
    %121 = vector.multi_reduction <add>, %83, %cst_41 [0] : vector<2x128xf32> to vector<128xf32>
    %122 = vector.shape_cast %121 : vector<128xf32> to vector<1x128xf32>
    %123 = arith.addf %122, %117 : vector<1x128xf32>
    %cst_42 = arith.constant dense<0.000000e+00> : vector<128xf32>
    %124 = vector.multi_reduction <add>, %115, %cst_42 [0] : vector<2x128xf32> to vector<128xf32>
    %125 = vector.shape_cast %124 : vector<128xf32> to vector<1x128xf32>
    %c2_i32 = arith.constant 2 : i32
    %126 = vector.broadcast %c2_i32 : i32 to vector<2x128xi32>
    %127 = arith.cmpi eq, %4, %126 : vector<2x128xi32>
    %128 = arith.extui %127 : vector<2x128xi1> to vector<2x128xi32>
    %129 = arith.sitofp %128 : vector<2x128xi32> to vector<2x128xf32>
    %130 = arith.mulf %21, %31 : vector<2x128xf32>
    %131 = math.absf %10 : vector<2x128xf32>
    %cst_43 = arith.constant 0.000000e+00 : f32
    %132 = vector.broadcast %cst_43 : f32 to vector<2x128xf32>
    %133 = arith.subf %132, %131 : vector<2x128xf32>
    %134 = math.exp %133 : vector<2x128xf32>
    %cst_44 = arith.constant 0.000000e+00 : f32
    %135 = vector.broadcast %cst_44 : f32 to vector<2x128xf32>
    %136 = arith.maximumf %10, %135 : vector<2x128xf32>
    %137 = arith.mulf %10, %129 : vector<2x128xf32>
    %138 = arith.subf %136, %137 : vector<2x128xf32>
    %139 = math.log1p %134 : vector<2x128xf32>
    %140 = arith.addf %138, %139 : vector<2x128xf32>
    %cst_45 = arith.constant 1.000000e+00 : f32
    %141 = vector.broadcast %cst_45 : f32 to vector<2x128xf32>
    %142 = arith.addf %141, %134 : vector<2x128xf32>
    %143 = tpu.reciprocal %142 {approx = true} : vector<2x128xf32> -> vector<2x128xf32>
    %144 = arith.mulf %142, %143 : vector<2x128xf32>
    %cst_46 = arith.constant 2.000000e+00 : f32
    %145 = vector.broadcast %cst_46 : f32 to vector<2x128xf32>
    %146 = arith.subf %145, %144 : vector<2x128xf32>
    %147 = arith.mulf %143, %146 : vector<2x128xf32>
    %cst_47 = arith.constant 0.000000e+00 : f32
    %148 = vector.broadcast %cst_47 : f32 to vector<2x128xf32>
    %149 = arith.cmpf oge, %10, %148 : vector<2x128xf32>
    %cst_48 = arith.constant 5.000000e-01 : f32
    %150 = vector.broadcast %cst_48 : f32 to vector<2x128xf32>
    %151 = arith.cmpf ogt, %129, %150 : vector<2x128xf32>
    %152 = arith.xori %149, %151 : vector<2x128xi1>
    %cst_49 = arith.constant 1.000000e+00 : f32
    %153 = vector.broadcast %cst_49 : f32 to vector<2x128xf32>
    %154 = arith.select %152, %153, %134 : vector<2x128xi1>, vector<2x128xf32>
    %155 = arith.mulf %154, %147 : vector<2x128xf32>
    %cst_50 = arith.constant -5.000000e-01 : f32
    %156 = vector.broadcast %cst_50 : f32 to vector<2x128xf32>
    %157 = arith.mulf %156, %129 : vector<2x128xf32>
    %cst_51 = arith.constant 7.500000e-01 : f32
    %158 = vector.broadcast %cst_51 : f32 to vector<2x128xf32>
    %159 = arith.addf %158, %157 : vector<2x128xf32>
    %160 = arith.mulf %155, %155 : vector<2x128xf32>
    %161 = arith.mulf %160, %140 : vector<2x128xf32>
    %162 = arith.mulf %161, %159 : vector<2x128xf32>
    %cst_52 = arith.constant dense<0.000000e+00> : vector<128xf32>
    %163 = vector.multi_reduction <add>, %129, %cst_52 [0] : vector<2x128xf32> to vector<128xf32>
    %164 = vector.shape_cast %163 : vector<128xf32> to vector<1x128xf32>
    %165 = arith.mulf %130, %129 : vector<2x128xf32>
    %cst_53 = arith.constant dense<0.000000e+00> : vector<128xf32>
    %166 = vector.multi_reduction <add>, %165, %cst_53 [0] : vector<2x128xf32> to vector<128xf32>
    %167 = vector.shape_cast %166 : vector<128xf32> to vector<1x128xf32>
    %cst_54 = arith.constant dense<0.000000e+00> : vector<128xf32>
    %168 = vector.multi_reduction <add>, %130, %cst_54 [0] : vector<2x128xf32> to vector<128xf32>
    %169 = vector.shape_cast %168 : vector<128xf32> to vector<1x128xf32>
    %170 = arith.addf %169, %164 : vector<1x128xf32>
    %cst_55 = arith.constant dense<0.000000e+00> : vector<128xf32>
    %171 = vector.multi_reduction <add>, %162, %cst_55 [0] : vector<2x128xf32> to vector<128xf32>
    %172 = vector.shape_cast %171 : vector<128xf32> to vector<1x128xf32>
    %c3_i32 = arith.constant 3 : i32
    %173 = vector.broadcast %c3_i32 : i32 to vector<2x128xi32>
    %174 = arith.cmpi eq, %4, %173 : vector<2x128xi32>
    %175 = arith.extui %174 : vector<2x128xi1> to vector<2x128xi32>
    %176 = arith.sitofp %175 : vector<2x128xi32> to vector<2x128xf32>
    %177 = arith.mulf %23, %31 : vector<2x128xf32>
    %178 = math.absf %12 : vector<2x128xf32>
    %cst_56 = arith.constant 0.000000e+00 : f32
    %179 = vector.broadcast %cst_56 : f32 to vector<2x128xf32>
    %180 = arith.subf %179, %178 : vector<2x128xf32>
    %181 = math.exp %180 : vector<2x128xf32>
    %cst_57 = arith.constant 0.000000e+00 : f32
    %182 = vector.broadcast %cst_57 : f32 to vector<2x128xf32>
    %183 = arith.maximumf %12, %182 : vector<2x128xf32>
    %184 = arith.mulf %12, %176 : vector<2x128xf32>
    %185 = arith.subf %183, %184 : vector<2x128xf32>
    %186 = math.log1p %181 : vector<2x128xf32>
    %187 = arith.addf %185, %186 : vector<2x128xf32>
    %cst_58 = arith.constant 1.000000e+00 : f32
    %188 = vector.broadcast %cst_58 : f32 to vector<2x128xf32>
    %189 = arith.addf %188, %181 : vector<2x128xf32>
    %190 = tpu.reciprocal %189 {approx = true} : vector<2x128xf32> -> vector<2x128xf32>
    %191 = arith.mulf %189, %190 : vector<2x128xf32>
    %cst_59 = arith.constant 2.000000e+00 : f32
    %192 = vector.broadcast %cst_59 : f32 to vector<2x128xf32>
    %193 = arith.subf %192, %191 : vector<2x128xf32>
    %194 = arith.mulf %190, %193 : vector<2x128xf32>
    %cst_60 = arith.constant 0.000000e+00 : f32
    %195 = vector.broadcast %cst_60 : f32 to vector<2x128xf32>
    %196 = arith.cmpf oge, %12, %195 : vector<2x128xf32>
    %cst_61 = arith.constant 5.000000e-01 : f32
    %197 = vector.broadcast %cst_61 : f32 to vector<2x128xf32>
    %198 = arith.cmpf ogt, %176, %197 : vector<2x128xf32>
    %199 = arith.xori %196, %198 : vector<2x128xi1>
    %cst_62 = arith.constant 1.000000e+00 : f32
    %200 = vector.broadcast %cst_62 : f32 to vector<2x128xf32>
    %201 = arith.select %199, %200, %181 : vector<2x128xi1>, vector<2x128xf32>
    %202 = arith.mulf %201, %194 : vector<2x128xf32>
    %cst_63 = arith.constant -5.000000e-01 : f32
    %203 = vector.broadcast %cst_63 : f32 to vector<2x128xf32>
    %204 = arith.mulf %203, %176 : vector<2x128xf32>
    %cst_64 = arith.constant 7.500000e-01 : f32
    %205 = vector.broadcast %cst_64 : f32 to vector<2x128xf32>
    %206 = arith.addf %205, %204 : vector<2x128xf32>
    %207 = arith.mulf %202, %202 : vector<2x128xf32>
    %208 = arith.mulf %207, %187 : vector<2x128xf32>
    %209 = arith.mulf %208, %206 : vector<2x128xf32>
    %cst_65 = arith.constant dense<0.000000e+00> : vector<128xf32>
    %210 = vector.multi_reduction <add>, %176, %cst_65 [0] : vector<2x128xf32> to vector<128xf32>
    %211 = vector.shape_cast %210 : vector<128xf32> to vector<1x128xf32>
    %212 = arith.mulf %177, %176 : vector<2x128xf32>
    %cst_66 = arith.constant dense<0.000000e+00> : vector<128xf32>
    %213 = vector.multi_reduction <add>, %212, %cst_66 [0] : vector<2x128xf32> to vector<128xf32>
    %214 = vector.shape_cast %213 : vector<128xf32> to vector<1x128xf32>
    %cst_67 = arith.constant dense<0.000000e+00> : vector<128xf32>
    %215 = vector.multi_reduction <add>, %177, %cst_67 [0] : vector<2x128xf32> to vector<128xf32>
    %216 = vector.shape_cast %215 : vector<128xf32> to vector<1x128xf32>
    %217 = arith.addf %216, %211 : vector<1x128xf32>
    %cst_68 = arith.constant dense<0.000000e+00> : vector<128xf32>
    %218 = vector.multi_reduction <add>, %209, %cst_68 [0] : vector<2x128xf32> to vector<128xf32>
    %219 = vector.shape_cast %218 : vector<128xf32> to vector<1x128xf32>
    %c0_69 = arith.constant 0 : index
    %c0_70 = arith.constant 0 : index
    %c0_71 = arith.constant 0 : index
    %c0_72 = arith.constant 0 : index
    %220 = vector.load %arg5[%c0_69, %c0_70, %c0_71, %c0_72] : memref<1x1x16x128xf32, #tpu.memory_space<vmem>>, vector<1x1x16x128xf32>
    %221 = vector.shape_cast %220 : vector<1x1x16x128xf32> to vector<16x128xf32>
    %222 = tpu.concatenate %73, %120, %167, %214, %76, %123, %170, %217, %70, %117, %164, %211, %78, %125, %172, %219 in 0 : vector<1x128xf32>, vector<1x128xf32>, vector<1x128xf32>, vector<1x128xf32>, vector<1x128xf32>, vector<1x128xf32>, vector<1x128xf32>, vector<1x128xf32>, vector<1x128xf32>, vector<1x128xf32>, vector<1x128xf32>, vector<1x128xf32>, vector<1x128xf32>, vector<1x128xf32>, vector<1x128xf32>, vector<1x128xf32> -> vector<16x128xf32>
    %223 = arith.addf %221, %222 : vector<16x128xf32>
    %c0_73 = arith.constant 0 : index
    %c0_74 = arith.constant 0 : index
    %c0_75 = arith.constant 0 : index
    %c0_76 = arith.constant 0 : index
    %224 = vector.load %arg5[%c0_73, %c0_74, %c0_75, %c0_76] : memref<1x1x16x128xf32, #tpu.memory_space<vmem>>, vector<1x1x16x128xf32>
    %225 = vector.shape_cast %224 : vector<1x1x16x128xf32> to vector<16x128xf32>
    %226 = vector.shape_cast %223 : vector<16x128xf32> to vector<1x1x16x128xf32>
    tpu.vector_store %arg5[%c0_73, %c0_74, %c0_75, %c0_76], %226 {strides = array<i32>} : memref<1x1x16x128xf32, #tpu.memory_space<vmem>>, vector<1x1x16x128xf32>,
    return
  }
  func.func @transform_0(%arg0: i32, %arg1: i32, %arg2: i32) -> (i32, i32, i32, i32) {
    %c1_i32 = arith.constant 1 : i32
    %0 = arith.muli %arg1, %c1_i32 : i32
    %1 = arith.addi %0, %arg2 : i32
    %c0_i32 = arith.constant 0 : i32
    %c0_i32_0 = arith.constant 0 : i32
    %c0_i32_1 = arith.constant 0 : i32
    return %arg0, %c0_i32, %1, %c0_i32_0 : i32, i32, i32, i32
  }
  func.func @transform_1(%arg0: i32, %arg1: i32, %arg2: i32) -> (i32, i32, i32) {
    %c1_i32 = arith.constant 1 : i32
    %0 = arith.muli %arg1, %c1_i32 : i32
    %1 = arith.addi %0, %arg2 : i32
    %c0_i32 = arith.constant 0 : i32
    %c0_i32_0 = arith.constant 0 : i32
    return %arg0, %1, %c0_i32 : i32, i32, i32
  }
  func.func @transform_2(%arg0: i32, %arg1: i32, %arg2: i32) -> (i32, i32, i32, i32) {
    %c0_i32 = arith.constant 0 : i32
    %c0_i32_0 = arith.constant 0 : i32
    %c0_i32_1 = arith.constant 0 : i32
    return %arg0, %arg1, %c0_i32, %c0_i32_0 : i32, i32, i32, i32
  }
}

</mosaic_0001>

<llo_original>
// kernel: hyperloss_forward.1
$region0: #{hyperloss_forward.1}
  #allocation0 [shape = 'u32[]', space=smem, size = 0x4, offset = 0x4, fixed_abs, tag = 'smem constant byte address 0x4 - core index']
  #allocation1 [shape = 'u32[72,128]{1,0:T(1,128)}', space=vmem, size = 0x9000, scoped, tag = 'internal scratch']
  %s0 = inlined_call_operand.vmem [shape: f32[2,4,2,128], index: 0, kind: input, shape index: {}]
  %s1 = inlined_call_operand.vmem [shape: s32[2,2,128], index: 1, kind: input, shape index: {}]
  %s2 = inlined_call_operand.vmem [shape: f32[2,1,16,128], index: 2, kind: output, shape index: {}]
  %s3 = sld [smem:[#allocation0]]
  $region45: #{hyperloss_forward.1} parent=0
    _
  %s5 = ssub.s32 1, %s3
  %s6 = scalar_select 0, %s5, %s3
  loop: start=0, step=1, limit=4
  $region2: #{hyperloss_forward.1} parent=0 // loop_pre_header
    _
  $region3: #{hyperloss_forward.1} parent=0 // loop_header
    %s8 = sphi 0, %s12
    %p9 = scmp.ge.s32.totalorder %s8, 4
    %s15 = sphi 0, %s34
    %s16 = sphi 0, %s30
    %s17 = sphi 0, %s26
    %s18 = sphi 0, %s15
    %s19 = sphi 0, %s16
    %s20 = sphi 0, %s17
    %s21 = sphi 0, %s18
    %s22 = sphi 0, %s19
    %s23 = sphi 0, %s20
    %s41 = sphi 0, %s43
    %s44 = sphi 0, %s41
    %s45 = sphi 0, %s44
    %s61 = sphi 0, %s45
    %s71 = sphi 0, %s73
    %s74 = sphi 0, %s71
    %s75 = sphi 0, %s74
    %s91 = sphi 0, %s75
    %s99 = sphi 0, %s101
    %s102 = sphi 0, %s99
    %s103 = sphi 0, %s102
    %s119 = sphi 0, %s103
  $region4: #{hyperloss_forward.1} parent=0 // loop_header_branch
    %11 = sbr.rel (%p9) target = $region8
  $region5: #{hyperloss_forward.1} parent=0 // loop_body
    %s13 = ssub.s32 %s8, 1
    %s14 = ssub.s32 %s8, 2
    %s24 = sadd.s32 1, %s17
    %p25 = scmp.ge.s32.totalorder %s24, 1
    %s26 = scalar_select %p25, 0, %s24
    %s27 = sadd.s32 1, %s16
    %s28 = scalar_select %p25, %s27, %s16
    %p29 = scmp.ge.s32.totalorder %s28, 1
    %s30 = scalar_select %p29, 0, %s28
    %s31 = sadd.s32 1, %s15
    %s32 = scalar_select %p29, %s31, %s15
    %p33 = scmp.ge.s32.totalorder %s32, 2
    %s34 = scalar_select %p33, 0, %s32
    %s35 = sadd.s32 %s16, %s17
    %s36 = sadd.s32 %s30, %s26
    %s37 = ssub.s32 %s15, %s34
    %s38 = ssub.s32 %s35, %s36
    %s39 = sor.u32 %s37, %s38
    %p40 = scmp.eq.s32.totalorder %s39, 0
    %s42 = sadd.s32 %s41, 1
    %s43 = scalar_select %p40, %s41, %s42
    %p46 = pneg %p40
    %p47 = scmp.eq.s32.totalorder %s8, 1
    %p48 = por %p46, %p47
    %p49 = scmp.ne.s32.totalorder %s41, %s44
    %p50 = scmp.eq.s32.totalorder %s8, 0
    %p51 = por %p49, %p50
    %p52 = scmp.ne.s32.totalorder %s41, %s44
    %p53 = scmp.eq.s32.totalorder %s13, 1
    %p54 = por %p52, %p53
    %p55 = scmp.ne.s32.totalorder %s44, %s45
    %p56 = scmp.eq.s32.totalorder %s13, 0
    %p57 = por %p55, %p56
    %p58 = scmp.ne.s32.totalorder %s44, %s45
    %p59 = scmp.eq.s32.totalorder %s14, 1
    %p60 = por %p58, %p59
    %p62 = scmp.ne.s32.totalorder %s45, %s61
    %p63 = scmp.eq.s32.totalorder %s14, 0
    %p64 = por %p62, %p63
    %s65 = sadd.s32 %s16, %s17
    %s66 = sadd.s32 %s30, %s26
    %s67 = ssub.s32 %s15, %s34
    %s68 = ssub.s32 %s65, %s66
    %s69 = sor.u32 %s67, %s68
    %p70 = scmp.eq.s32.totalorder %s69, 0
    %s72 = sadd.s32 %s71, 1
    %s73 = scalar_select %p70, %s71, %s72
    %p76 = pneg %p70
    %p77 = scmp.eq.s32.totalorder %s8, 1
    %p78 = por %p76, %p77
    %p79 = scmp.ne.s32.totalorder %s71, %s74
    %p80 = scmp.eq.s32.totalorder %s8, 0
    %p81 = por %p79, %p80
    %p82 = scmp.ne.s32.totalorder %s71, %s74
    %p83 = scmp.eq.s32.totalorder %s13, 1
    %p84 = por %p82, %p83
    %p85 = scmp.ne.s32.totalorder %s74, %s75
    %p86 = scmp.eq.s32.totalorder %s13, 0
    %p87 = por %p85, %p86
    %p88 = scmp.ne.s32.totalorder %s74, %s75
    %p89 = scmp.eq.s32.totalorder %s14, 1
    %p90 = por %p88, %p89
    %p92 = scmp.ne.s32.totalorder %s75, %s91
    %p93 = scmp.eq.s32.totalorder %s14, 0
    %p94 = por %p92, %p93
    %s95 = ssub.s32 %s15, %s34
    %s96 = ssub.s32 %s16, %s30
    %s97 = sor.u32 %s95, %s96
    %p98 = scmp.eq.s32.totalorder %s97, 0
    %s100 = sadd.s32 %s99, 1
    %s101 = scalar_select %p98, %s99, %s100
    %p104 = pneg %p98
    %p105 = scmp.eq.s32.totalorder %s8, 1
    %p106 = por %p104, %p105
    %p107 = scmp.ne.s32.totalorder %s99, %s102
    %p108 = scmp.eq.s32.totalorder %s8, 0
    %p109 = por %p107, %p108
    %p110 = scmp.ne.s32.totalorder %s99, %s102
    %p111 = scmp.eq.s32.totalorder %s13, 1
    %p112 = por %p110, %p111
    %p113 = scmp.ne.s32.totalorder %s102, %s103
    %p114 = scmp.eq.s32.totalorder %s13, 0
    %p115 = por %p113, %p114
    %p116 = scmp.ne.s32.totalorder %s102, %s103
    %p117 = scmp.eq.s32.totalorder %s14, 1
    %p118 = por %p116, %p117
    %p120 = scmp.ne.s32.totalorder %s103, %s119
    %p121 = scmp.eq.s32.totalorder %s14, 0
    %p122 = por %p120, %p121
    %p123 = scmp.le.s32.totalorder 1, %s8
    %p124 = scmp.lt.s32.totalorder %s8, 3
    %p125 = pnand %p123, %p124
    %p126 = pneg %p125
    // Predicated region
    $region9: #{hyperloss_forward.1} parent=5 // pred_check
      _
    $region10: #{hyperloss_forward.1} parent=5 // pred_check_branch
      %128 = sbr.rel (%p125) target = $region12
    $region11: #{hyperloss_forward.1} parent=5 // pred_region
      %s129 = ssub.s32 %s8, 1
    $region12: #{hyperloss_forward.1} parent=5 // pred_fallthru
      _
    %p130 = scmp.lt.s32.totalorder %s8, 2
    // Predicated region
    $region13: #{hyperloss_forward.1} parent=5 // pred_check
      %p131 = pneg %p130
    $region14: #{hyperloss_forward.1} parent=5 // pred_check_branch
      %133 = sbr.rel (%p131) target = $region16
    $region15: #{hyperloss_forward.1} parent=5 // pred_region
      // Predicated region
      $region17: #{hyperloss_forward.1} parent=15 // pred_check
        %p134 = pneg %p51
      $region18: #{hyperloss_forward.1} parent=15 // pred_check_branch
        %136 = sbr.rel (%p134) target = $region20
      $region19: #{hyperloss_forward.1} parent=15 // pred_region
        %s137 = sadd.s32 %s16, %s17
        %p138 = scmp.lt.s32.totalorder %s15, 1
        %s139 = scalar_select %p138, %s15, 1
        %p140 = scmp.lt.s32.totalorder %s137, 0
        %s141 = scalar_select %p140, %s137, 0
        %s142 = smul.addr %s139, 4
        %s143 = sadd.s32 %s141, %s142
        %s144 = smul.addr %s143, 2
        %s145 = scalar_lea.vmem %s0, %s144
        %s146 = sadd.s32 %s16, %s17
      $region20: #{hyperloss_forward.1} parent=15 // pred_fallthru
        _
      // Predicated region
      $region21: #{hyperloss_forward.1} parent=15 // pred_check
        %p147 = pneg %p81
      $region22: #{hyperloss_forward.1} parent=15 // pred_check_branch
        %149 = sbr.rel (%p147) target = $region24
      $region23: #{hyperloss_forward.1} parent=15 // pred_region
        %s150 = sadd.s32 %s16, %s17
        %p151 = scmp.lt.s32.totalorder %s15, 1
        %s152 = scalar_select %p151, %s15, 1
        %p153 = scmp.lt.s32.totalorder %s150, 0
        %s154 = scalar_select %p153, %s150, 0
        %s155 = sadd.s32 %s154, %s152
        %s156 = smul.addr %s155, 2
        %s157 = scalar_lea.vmem %s1, %s156
        %s158 = sadd.s32 %s16, %s17
      $region24: #{hyperloss_forward.1} parent=15 // pred_fallthru
        _
    $region16: #{hyperloss_forward.1} parent=5 // pred_fallthru
      _
    %p159 = scmp.le.s32.totalorder 1, %s8
    %p160 = scmp.lt.s32.totalorder %s8, 3
    %p161 = pnand %p159, %p160
    %p162 = pneg %p161
    // Predicated region
    $region25: #{hyperloss_forward.1} parent=5 // pred_check
      _
    $region26: #{hyperloss_forward.1} parent=5 // pred_check_branch
      %164 = sbr.rel (%p161) target = $region28
    $region27: #{hyperloss_forward.1} parent=5 // pred_region
      %s165 = ssub.s32 %s8, 1
      %s166 = sadd.s32 %s19, %s20
      %p167 = scmp.lt.s32.totalorder %s18, 1
      %s168 = scalar_select %p167, %s18, 1
      %p169 = scmp.lt.s32.totalorder %s166, 0
      %s170 = scalar_select %p169, %s166, 0
      %s171 = smul.addr %s168, 4
      %s172 = sadd.s32 %s170, %s171
      %s173 = smul.addr %s172, 2
      %s174 = scalar_lea.vmem %s0, %s173
      %p175 = pneg %p57
      %p176 = pneg %p54
      %s177 = sadd.s32 %s19, %s20
      %p178 = scmp.lt.s32.totalorder %s18, 1
      %s179 = scalar_select %p178, %s18, 1
      %p180 = scmp.lt.s32.totalorder %s177, 0
      %s181 = scalar_select %p180, %s177, 0
      %s182 = sadd.s32 %s181, %s179
      %s183 = smul.addr %s182, 2
      %s184 = scalar_lea.vmem %s1, %s183
      %p185 = pneg %p87
      %p186 = pneg %p84
      %p187 = pneg %p115
      %p188 = pneg %p112
      %p189 = scmp.lt.s32.totalorder %s18, 1
      %s190 = scalar_select %p189, %s18, 1
      %p191 = scmp.lt.s32.totalorder %s19, 0
      %s192 = scalar_select %p191, %s19, 0
      %s193 = smul.addr %s192, 2
      %s194 = smul.addr %s190, 2
      %s195 = sadd.s32 %s193, %s194
      %s196 = smul.addr %s195, 8
      %s197 = scalar_lea.vmem %s2, %s196
      %s198 = sadd.s32 %s19, %s20
      %p199 = scmp.lt.s32.totalorder %s18, 1
      %s200 = scalar_select %p199, %s18, 1
      %p201 = scmp.lt.s32.totalorder %s198, 0
      %s202 = scalar_select %p201, %s198, 0
      %s203 = smul.addr %s200, 4
      %s204 = sadd.s32 %s202, %s203
      %s205 = smul.addr %s204, 2
      %s206 = scalar_lea.vmem %s0, %s205
      %s207 = sadd.s32 %s19, %s20
      %s208 = sadd.s32 %s19, %s20
      %p209 = scmp.lt.s32.totalorder %s18, 1
      %s210 = scalar_select %p209, %s18, 1
      %p211 = scmp.lt.s32.totalorder %s208, 0
      %s212 = scalar_select %p211, %s208, 0
      %s213 = sadd.s32 %s212, %s210
      %s214 = smul.addr %s213, 2
      %s215 = scalar_lea.vmem %s1, %s214
      %s216 = sadd.s32 %s19, %s20
      %p217 = scmp.lt.s32.totalorder %s18, 1
      %s218 = scalar_select %p217, %s18, 1
      %p219 = scmp.lt.s32.totalorder %s19, 0
      %s220 = scalar_select %p219, %s19, 0
      %s221 = smul.addr %s220, 2
      %s222 = smul.addr %s218, 2
      %s223 = sadd.s32 %s221, %s222
      %s224 = smul.addr %s223, 8
      %s225 = scalar_lea.vmem %s2, %s224
      %p226 = scmp.eq.s32.totalorder %s20, 0
      // Predicated region
      $region29: #{hyperloss_forward.1} parent=27 // pred_check
        %p227 = pneg %p226
      $region30: #{hyperloss_forward.1} parent=27 // pred_check_branch
        %229 = sbr.rel (%p227) target = $region32
      $region31: #{hyperloss_forward.1} parent=27 // pred_region
        %230 = vst [vmem:[%s225] sm:$0xff] 0.0
        %231 = vst [vmem:[%s225 + $0x8] sm:$0xff] 0.0
      $region32: #{hyperloss_forward.1} parent=27 // pred_fallthru
        _
      %v232 = vld [vmem:[%s215] sm:$0x3]
      %v233 = vld [vmem:[%s206] sm:$0x3]
      %s234 = scalar_lea.vmem %s206, 2
      %v235 = vld [vmem:[%s234] sm:$0x3]
      %s236 = scalar_lea.vmem %s206, 4
      %v237 = vld [vmem:[%s236] sm:$0x3]
      %s238 = scalar_lea.vmem %s206, 6
      %v239 = vld [vmem:[%s238] sm:$0x3]
      %v240 = vmax.f32 %v233, %v235
      %v241 = vmax.f32 %v240, %v237
      %v242 = vmax.f32 %v241, %v239
      %v243 = vsub.f32 %v233, %v242
      %v244 = vmul.f32 %v243, 1.442695
      %v245 = vpow.pop %v244
      %v246 = vsub.f32 %v235, %v242
      %v247 = vmul.f32 %v246, 1.442695
      %v248 = vpow.pop %v247
      %v249 = vsub.f32 %v237, %v242
      %v250 = vmul.f32 %v249, 1.442695
      %v251 = vpow.pop %v250
      %v252 = vsub.f32 %v239, %v242
      %v253 = vmul.f32 %v252, 1.442695
      %v254 = vpow.pop %v253
      %v255 = vadd.f32 %v245, %v248
      %v256 = vadd.f32 %v255, %v251
      %v257 = vadd.f32 %v256, %v254
      %v258 = vrcp.pop %v257
      %v259 = vmul.f32 %v257, %v258
      %v260 = vsub.f32 2.0, %v259
      %v261 = vmul.f32 %v258, %v260
      %vm262 = vcmp.eq.s32.totalorder %v232, 0
      %v263 = vsel %vm262, 1, 0
      %v264 = vcvt.s32.f32 %v263
      %v265 = vmul.f32 %v245, %v261
      %v266 = vand.u32 2147483647, %v233
      %v267 = vsub.f32 0.0, %v266
      %v268 = vmul.f32 %v267, 1.442695
      %v269 = vpow.pop %v268
      %v270 = vmax.f32 %v233, 0.0
      %v271 = vmul.f32 %v233, %v264
      %v272 = vsub.f32 %v270, %v271
      %v273 = vadd.f32 %v269, 1.0
      %v274 = vlog2.pop %v273
      %v275 = vmul.f32 %v274, 0.6931472
      %v276 = vmul.f32 -0.5, %v269
      %v277 = vadd.f32 %v276, 1.0
      %v278 = vmul.f32 %v277, %v269
      %v279 = vand.u32 2147483647, %v269
      %vm280 = vcmp.lt.f32.partialorder %v279, 0.0004427343
      %v281 = vsel %vm280, %v278, %v275
      %v282 = vadd.f32 %v272, %v281
      %v283 = vadd.f32 %v269, 1.0
      %v284 = vrcp.pop %v283
      %v285 = vmul.f32 %v283, %v284
      %v286 = vsub.f32 2.0, %v285
      %v287 = vmul.f32 %v284, %v286
      %vm288 = vcmp.ge.f32.partialorder %v233, 0.0
      %vm289 = vcmp.gt.f32.partialorder %v264, 0.5
      %vm290 = vmxor %vm288, %vm289
      %v291 = vsel %vm290, 1.0, %v269
      %v292 = vmul.f32 %v291, %v287
      %v293 = vmul.f32 %v264, -0.5
      %v294 = vadd.f32 %v293, 0.75
      %v295 = vmul.f32 %v292, %v292
      %v296 = vmul.f32 %v295, %v282
      %v297 = vmul.f32 %v296, %v294
      %vm298 = vcmask 1041408
      %v299 = vsel %vm298, %v264, 0.0
      %v300 = vrot.slane %v299, 4
      %v301 = vadd.f32 %v299, %v300
      %v302 = vrot.slane %v301, 2
      %v303 = vadd.f32 %v301, %v302
      %v304 = vrot.slane %v303, 1
      %v305 = vadd.f32 %v303, %v304
      %v306 = vmul.f32 %v265, %v264
      %v307 = vsel %vm298, %v306, 0.0
      %v308 = vrot.slane %v307, 4
      %v309 = vadd.f32 %v307, %v308
      %v310 = vrot.slane %v309, 2
      %v311 = vadd.f32 %v309, %v310
      %v312 = vrot.slane %v311, 1
      %v313 = vadd.f32 %v311, %v312
      %v314 = vsel %vm298, %v265, 0.0
      %v315 = vrot.slane %v314, 4
      %v316 = vadd.f32 %v314, %v315
      %v317 = vrot.slane %v316, 2
      %v318 = vadd.f32 %v316, %v317
      %v319 = vrot.slane %v318, 1
      %v320 = vadd.f32 %v318, %v319
      %v321 = vadd.f32 %v320, %v305
      %v322 = vsel %vm298, %v297, 0.0
      %v323 = vrot.slane %v322, 4
      %v324 = vadd.f32 %v322, %v323
      %v325 = vrot.slane %v324, 2
      %v326 = vadd.f32 %v324, %v325
      %v327 = vrot.slane %v326, 1
      %v328 = vadd.f32 %v326, %v327
      %vm329 = vcmp.eq.s32.totalorder %v232, 1
      %v330 = vsel %vm329, 1, 0
      %v331 = vcvt.s32.f32 %v330
      %v332 = vmul.f32 %v248, %v261
      %v333 = vand.u32 2147483647, %v235
      %v334 = vsub.f32 0.0, %v333
      %v335 = vmul.f32 %v334, 1.442695
      %v336 = vpow.pop %v335
      %v337 = vmax.f32 %v235, 0.0
      %v338 = vmul.f32 %v235, %v331
      %v339 = vsub.f32 %v337, %v338
      %v340 = vadd.f32 %v336, 1.0
      %v341 = vlog2.pop %v340
      %v342 = vmul.f32 %v341, 0.6931472
      %v343 = vmul.f32 -0.5, %v336
      %v344 = vadd.f32 %v343, 1.0
      %v345 = vmul.f32 %v344, %v336
      %v346 = vand.u32 2147483647, %v336
      %vm347 = vcmp.lt.f32.partialorder %v346, 0.0004427343
      %v348 = vsel %vm347, %v345, %v342
      %v349 = vadd.f32 %v339, %v348
      %v350 = vadd.f32 %v336, 1.0
      %v351 = vrcp.pop %v350
      %v352 = vmul.f32 %v350, %v351
      %v353 = vsub.f32 2.0, %v352
      %v354 = vmul.f32 %v351, %v353
      %vm355 = vcmp.ge.f32.partialorder %v235, 0.0
      %vm356 = vcmp.gt.f32.partialorder %v331, 0.5
      %vm357 = vmxor %vm355, %vm356
      %v358 = vsel %vm357, 1.0, %v336
      %v359 = vmul.f32 %v358, %v354
      %v360 = vmul.f32 %v331, -0.5
      %v361 = vadd.f32 %v360, 0.75
      %v362 = vmul.f32 %v359, %v359
      %v363 = vmul.f32 %v362, %v349
      %v364 = vmul.f32 %v363, %v361
      %v365 = vsel %vm298, %v331, 0.0
      %v366 = vrot.slane %v365, 4
      %v367 = vadd.f32 %v365, %v366
      %v368 = vrot.slane %v367, 2
      %v369 = vadd.f32 %v367, %v368
      %v370 = vrot.slane %v369, 1
      %v371 = vadd.f32 %v369, %v370
      %v372 = vmul.f32 %v332, %v331
      %v373 = vsel %vm298, %v372, 0.0
      %v374 = vrot.slane %v373, 4
      %v375 = vadd.f32 %v373, %v374
      %v376 = vrot.slane %v375, 2
      %v377 = vadd.f32 %v375, %v376
      %v378 = vrot.slane %v377, 1
      %v379 = vadd.f32 %v377, %v378
      %v380 = vsel %vm298, %v332, 0.0
      %v381 = vrot.slane %v380, 4
      %v382 = vadd.f32 %v380, %v381
      %v383 = vrot.slane %v382, 2
      %v384 = vadd.f32 %v382, %v383
      %v385 = vrot.slane %v384, 1
      %v386 = vadd.f32 %v384, %v385
      %v387 = vadd.f32 %v386, %v371
      %v388 = vsel %vm298, %v364, 0.0
      %v389 = vrot.slane %v388, 4
      %v390 = vadd.f32 %v388, %v389
      %v391 = vrot.slane %v390, 2
      %v392 = vadd.f32 %v390, %v391
      %v393 = vrot.slane %v392, 1
      %v394 = vadd.f32 %v392, %v393
      %vm395 = vcmp.eq.s32.totalorder %v232, 2
      %v396 = vsel %vm395, 1, 0
      %v397 = vcvt.s32.f32 %v396
      %v398 = vmul.f32 %v251, %v261
      %v399 = vand.u32 2147483647, %v237
      %v400 = vsub.f32 0.0, %v399
      %v401 = vmul.f32 %v400, 1.442695
      %v402 = vpow.pop %v401
      %v403 = vmax.f32 %v237, 0.0
      %v404 = vmul.f32 %v237, %v397
      %v405 = vsub.f32 %v403, %v404
      %v406 = vadd.f32 %v402, 1.0
      %v407 = vlog2.pop %v406
      %v408 = vmul.f32 %v407, 0.6931472
      %v409 = vmul.f32 -0.5, %v402
      %v410 = vadd.f32 %v409, 1.0
      %v411 = vmul.f32 %v410, %v402
      %v412 = vand.u32 2147483647, %v402
      %vm413 = vcmp.lt.f32.partialorder %v412, 0.0004427343
      %v414 = vsel %vm413, %v411, %v408
      %v415 = vadd.f32 %v405, %v414
      %v416 = vadd.f32 %v402, 1.0
      %v417 = vrcp.pop %v416
      %v418 = vmul.f32 %v416, %v417
      %v419 = vsub.f32 2.0, %v418
      %v420 = vmul.f32 %v417, %v419
      %vm421 = vcmp.ge.f32.partialorder %v237, 0.0
      %vm422 = vcmp.gt.f32.partialorder %v397, 0.5
      %vm423 = vmxor %vm421, %vm422
      %v424 = vsel %vm423, 1.0, %v402
      %v425 = vmul.f32 %v424, %v420
      %v426 = vmul.f32 %v397, -0.5
      %v427 = vadd.f32 %v426, 0.75
      %v428 = vmul.f32 %v425, %v425
      %v429 = vmul.f32 %v428, %v415
      %v430 = vmul.f32 %v429, %v427
      %v431 = vsel %vm298, %v397, 0.0
      %v432 = vrot.slane %v431, 4
      %v433 = vadd.f32 %v431, %v432
      %v434 = vrot.slane %v433, 2
      %v435 = vadd.f32 %v433, %v434
      %v436 = vrot.slane %v435, 1
      %v437 = vadd.f32 %v435, %v436
      %v438 = vmul.f32 %v398, %v397
      %v439 = vsel %vm298, %v438, 0.0
      %v440 = vrot.slane %v439, 4
      %v441 = vadd.f32 %v439, %v440
      %v442 = vrot.slane %v441, 2
      %v443 = vadd.f32 %v441, %v442
      %v444 = vrot.slane %v443, 1
      %v445 = vadd.f32 %v443, %v444
      %v446 = vsel %vm298, %v398, 0.0
      %v447 = vrot.slane %v446, 4
      %v448 = vadd.f32 %v446, %v447
      %v449 = vrot.slane %v448, 2
      %v450 = vadd.f32 %v448, %v449
      %v451 = vrot.slane %v450, 1
      %v452 = vadd.f32 %v450, %v451
      %v453 = vadd.f32 %v452, %v437
      %v454 = vsel %vm298, %v430, 0.0
      %v455 = vrot.slane %v454, 4
      %v456 = vadd.f32 %v454, %v455
      %v457 = vrot.slane %v456, 2
      %v458 = vadd.f32 %v456, %v457
      %v459 = vrot.slane %v458, 1
      %v460 = vadd.f32 %v458, %v459
      %vm461 = vcmp.eq.s32.totalorder %v232, 3
      %v462 = vsel %vm461, 1, 0
      %v463 = vcvt.s32.f32 %v462
      %v464 = vmul.f32 %v254, %v261
      %v465 = vand.u32 2147483647, %v239
      %v466 = vsub.f32 0.0, %v465
      %v467 = vmul.f32 %v466, 1.442695
      %v468 = vpow.pop %v467
      %v469 = vmax.f32 %v239, 0.0
      %v470 = vmul.f32 %v239, %v463
      %v471 = vsub.f32 %v469, %v470
      %v472 = vadd.f32 %v468, 1.0
      %v473 = vlog2.pop %v472
      %v474 = vmul.f32 %v473, 0.6931472
      %v475 = vmul.f32 -0.5, %v468
      %v476 = vadd.f32 %v475, 1.0
      %v477 = vmul.f32 %v476, %v468
      %v478 = vand.u32 2147483647, %v468
      %vm479 = vcmp.lt.f32.partialorder %v478, 0.0004427343
      %v480 = vsel %vm479, %v477, %v474
      %v481 = vadd.f32 %v471, %v480
      %v482 = vadd.f32 %v468, 1.0
      %v483 = vrcp.pop %v482
      %v484 = vmul.f32 %v482, %v483
      %v485 = vsub.f32 2.0, %v484
      %v486 = vmul.f32 %v483, %v485
      %vm487 = vcmp.ge.f32.partialorder %v239, 0.0
      %vm488 = vcmp.gt.f32.partialorder %v463, 0.5
      %vm489 = vmxor %vm487, %vm488
      %v490 = vsel %vm489, 1.0, %v468
      %v491 = vmul.f32 %v490, %v486
      %v492 = vmul.f32 %v463, -0.5
      %v493 = vadd.f32 %v492, 0.75
      %v494 = vmul.f32 %v491, %v491
      %v495 = vmul.f32 %v494, %v481
      %v496 = vmul.f32 %v495, %v493
      %v497 = vsel %vm298, %v463, 0.0
      %v498 = vrot.slane %v497, 4
      %v499 = vadd.f32 %v497, %v498
      %v500 = vrot.slane %v499, 2
      %v501 = vadd.f32 %v499, %v500
      %v502 = vrot.slane %v501, 1
      %v503 = vadd.f32 %v501, %v502
      %v504 = vmul.f32 %v464, %v463
      %v505 = vsel %vm298, %v504, 0.0
      %v506 = vrot.slane %v505, 4
      %v507 = vadd.f32 %v505, %v506
      %v508 = vrot.slane %v507, 2
      %v509 = vadd.f32 %v507, %v508
      %v510 = vrot.slane %v509, 1
      %v511 = vadd.f32 %v509, %v510
      %v512 = vsel %vm298, %v464, 0.0
      %v513 = vrot.slane %v512, 4
      %v514 = vadd.f32 %v512, %v513
      %v515 = vrot.slane %v514, 2
      %v516 = vadd.f32 %v514, %v515
      %v517 = vrot.slane %v516, 1
      %v518 = vadd.f32 %v516, %v517
      %v519 = vadd.f32 %v518, %v503
      %v520 = vsel %vm298, %v496, 0.0
      %v521 = vrot.slane %v520, 4
      %v522 = vadd.f32 %v520, %v521
      %v523 = vrot.slane %v522, 2
      %v524 = vadd.f32 %v522, %v523
      %v525 = vrot.slane %v524, 1
      %v526 = vadd.f32 %v524, %v525
      %v527 = vld [vmem:[%s225] sm:$0xff]
      %v528 = vld [vmem:[%s225 + $0x8] sm:$0xff]
      %vm529 = vcmask 1040384
      %v530 = vsel %vm529, %v313, %v379
      %v531 = vsel %vm298, %v530, %v445
      %vm532 = vcmask 1042432
      %v533 = vsel %vm532, %v531, %v511
      %vm534 = vcmask 1043456
      %v535 = vsel %vm534, %v533, %v321
      %vm536 = vcmask 1044480
      %v537 = vsel %vm536, %v535, %v387
      %vm538 = vcmask 1045504
      %v539 = vsel %vm538, %v537, %v453
      %vm540 = vcmask 1046528
      %v541 = vsel %vm540, %v539, %v519
      %v542 = vsel %vm529, %v305, %v371
      %v543 = vsel %vm298, %v542, %v437
      %v544 = vsel %vm532, %v543, %v503
      %v545 = vsel %vm534, %v544, %v328
      %v546 = vsel %vm536, %v545, %v394
      %v547 = vsel %vm538, %v546, %v460
      %v548 = vsel %vm540, %v547, %v526
      %v549 = vadd.f32 %v527, %v541
      %v550 = vadd.f32 %v528, %v548
      %551 = vst [vmem:[%s225] sm:$0xff] %v549
      %552 = vst [vmem:[%s225 + $0x8] sm:$0xff] %v550
      %p553 = scmp.lt.s32.totalorder %s18, 1
      %s554 = scalar_select %p553, %s18, 1
      %p555 = scmp.lt.s32.totalorder %s19, 0
      %s556 = scalar_select %p555, %s19, 0
      %s557 = smul.addr %s556, 2
      %s558 = smul.addr %s554, 2
      %s559 = sadd.s32 %s557, %s558
      %s560 = smul.addr %s559, 8
      %s561 = scalar_lea.vmem %s2, %s560
      // Predicated region
      $region33: #{hyperloss_forward.1} parent=27 // pred_check
        %p562 = pneg %p112
      $region34: #{hyperloss_forward.1} parent=27 // pred_check_branch
        %564 = sbr.rel (%p562) target = $region36
      $region35: #{hyperloss_forward.1} parent=27 // pred_region
        _
      $region36: #{hyperloss_forward.1} parent=27 // pred_fallthru
        _
    $region28: #{hyperloss_forward.1} parent=5 // pred_fallthru
      _
    %p565 = scmp.le.s32.totalorder 2, %s8
    // Predicated region
    $region37: #{hyperloss_forward.1} parent=5 // pred_check
      %p566 = pneg %p565
    $region38: #{hyperloss_forward.1} parent=5 // pred_check_branch
      %568 = sbr.rel (%p566) target = $region40
    $region39: #{hyperloss_forward.1} parent=5 // pred_region
      %s569 = ssub.s32 %s8, 2
      // Predicated region
      $region41: #{hyperloss_forward.1} parent=39 // pred_check
        %p570 = pneg %p118
      $region42: #{hyperloss_forward.1} parent=39 // pred_check_branch
        %572 = sbr.rel (%p570) target = $region44
      $region43: #{hyperloss_forward.1} parent=39 // pred_region
        %p573 = scmp.lt.s32.totalorder %s21, 1
        %s574 = scalar_select %p573, %s21, 1
        %p575 = scmp.lt.s32.totalorder %s22, 0
        %s576 = scalar_select %p575, %s22, 0
        %s577 = smul.addr %s576, 2
        %s578 = smul.addr %s574, 2
        %s579 = sadd.s32 %s577, %s578
        %s580 = smul.addr %s579, 8
        %s581 = scalar_lea.vmem %s2, %s580
      $region44: #{hyperloss_forward.1} parent=39 // pred_fallthru
        _
    $region40: #{hyperloss_forward.1} parent=5 // pred_fallthru
      _
  $region6: #{hyperloss_forward.1} parent=0 // loop_footer
    %s12 = sadd.s32 1, %s8
  $region7: #{hyperloss_forward.1} parent=0 // loop_footer_branch
    %7 = sbr.rel target = $region3
  $region8: #{hyperloss_forward.1} parent=0 // loop_exit
    _

</llo_original>
